<compile_context>
chip_gen: v6e
topology: v6e:2x2x1
jax: 0.10.0
libtpu: 0.0.40
codegen_flags: <defaults>
</compile_context>

<pallas_src>
import math

import jax
import jax.numpy as jnp
from jax.experimental import pallas as pl
from jax.experimental.pallas import tpu as pltpu


# ----------------------------- in-kernel GELU (exact) -----------------------------
# Mosaic has no native erf lowering; use Abramowitz & Stegun 7.1.26 (|err| <= 1.5e-7)
# built from exp/mul/add so the exact (erf-based) nn.GELU() semantics are preserved
# within tolerance.  The exp and the approx reciprocal both go to the EUP slot.
_A1, _A2, _A3, _A4, _A5 = 0.254829592, -0.284496736, 1.421413741, -1.453152027, 1.061405429
_P = 0.3275911
_INV_SQRT2 = 0.7071067811865476


def _erf(z):
    az = jnp.abs(z)
    d = 1.0 + _P * az
    t = pl.reciprocal(d, approx=True)     # EUP vrcp (frees VALU slots)
    t = t * (2.0 - d * t)                 # one Newton step -> ~f32 accuracy
    poly = ((((_A5 * t + _A4) * t + _A3) * t + _A2) * t + _A1) * t
    e = 1.0 - poly * jnp.exp(-az * az)    # exp also on the EUP
    return jnp.where(z < 0.0, -e, e)


def _gelu_exact(x):
    return 0.5 * x * (1.0 + _erf(x * _INV_SQRT2))


# ----------------------------------- kernel ---------------------------------------
def ffn_kernel(x_ref, w1_ref, b1_ref, w2_ref, b2_ref, out_ref):
    x = x_ref[...]                                                    # (bm, E) bf16
    h = jnp.dot(x, w1_ref[...], preferred_element_type=jnp.float32) + b1_ref[0]   # (bm, H) f32
    h = _gelu_exact(h)
    y = jnp.dot(h.astype(w2_ref.dtype), w2_ref[...],
                preferred_element_type=jnp.float32) + b2_ref[0]       # (bm, E) f32
    # TODO(synk): feed_forward_dropout is identity in eval mode (no RNG mask applied).
    out_ref[...] = y.astype(out_ref.dtype)


# ---------------------------------- wrapper ----------------------------------------
_ROW_TILE_CANDS = (4096, 2048, 1024, 512, 256, 128, 64, 32, 16, 8)


def _num_tensorcores():
    # v7x (and v4 megacore) expose 2 TensorCores per device that a "parallel" grid
    # axis can shard across; v5e/v6e have 1 TC, so the grid is a serial loop there.
    try:
        kind = jax.devices()[0].device_kind.lower()
    except Exception:  # pragma: no cover - defensive
        return 1
    return 2 if ("v7" in kind or "v4" in kind) else 1


def _pick_block_rows(n, num_cores):
    if num_cores >= 2:
        # Largest tile that still gives every TensorCore at least one step.
        for cand in _ROW_TILE_CANDS:
            if n % cand == 0 and n // cand >= num_cores:
                return cand
    # Single TC (or nothing splits cleanly): a single big step is strictly best.
    if n <= _ROW_TILE_CANDS[0]:
        return n
    for cand in _ROW_TILE_CANDS:
        if n % cand == 0:
            return cand
    return n


def feed_forward(x, params, *, block_rows=None):
    B, S, E = x.shape
    w1, b1, w2, b2 = params            # w1:(E,H) b1:(1,H) w2:(H,E) b2:(1,E)
    H = w1.shape[1]
    out_dtype = x.dtype

    N = B * S
    # Flatten batch*seq -> one row-tiled grid; cast MXU operands to bf16
    # (f32 accumulation is requested inside the kernel).
    x2 = x.reshape(N, E).astype(jnp.bfloat16)
    w1b = w1.astype(jnp.bfloat16)
    w2b = w2.astype(jnp.bfloat16)
    b1f = b1.astype(jnp.float32)
    b2f = b2.astype(jnp.float32)

    if block_rows is None:
        block_rows = _pick_block_rows(N, _num_tensorcores())
    assert N % block_rows == 0, "B*S must be divisible by the row tile"
    grid = (N // block_rows,)

    # Scoped-VMEM budget: double-buffered x (bf16) + out (f32), resident weights
    # (bf16, conservatively counted double-buffered), biases, and the f32 hidden
    # temporaries.  2x headroom, clamped to [16 MiB, 64 MiB] (v5e scoped default is
    # only 16 MiB; v7x physical VMEM is 64 MiB).
    est = (2 * block_rows * E * 2          # x tiles
           + 2 * block_rows * E * 4        # out tiles
           + 2 * (E * H + H * E) * 2       # weights
           + 2 * (H + E) * 4               # biases
           + 2 * block_rows * H * 4)       # h / gelu temporaries
    vmem_limit = int(min(max(2 * est, 16 << 20), 64 << 20))

    out2 = pl.pallas_call(
        ffn_kernel,
        out_shape=jax.ShapeDtypeStruct((N, E), out_dtype),
        grid_spec=pltpu.PrefetchScalarGridSpec(
            num_scalar_prefetch=0,
            grid=grid,
            in_specs=[
                pl.BlockSpec((block_rows, E), lambda i: (i, 0)),   # x rows
                pl.BlockSpec((E, H), lambda i: (0, 0)),            # w1 (resident)
                pl.BlockSpec((1, H), lambda i: (0, 0)),            # b1
                pl.BlockSpec((H, E), lambda i: (0, 0)),            # w2 (resident)
                pl.BlockSpec((1, E), lambda i: (0, 0)),            # b2
            ],
            out_specs=pl.BlockSpec((block_rows, E), lambda i: (i, 0)),
        ),
        compiler_params=pltpu.CompilerParams(
            dimension_semantics=("parallel",),
            vmem_limit_bytes=vmem_limit),
    )(x2, w1b, b1f, w2b, b2f)

    return out2.reshape(B, S, E)


# --------------------------------- reference ---------------------------------------
def _reference(x, params):
    # Pure-JAX f32 reference mirroring the PyTorch forward (eval mode, exact GELU).
    w1, b1, w2, b2 = params
    h = jax.nn.gelu(x @ w1 + b1[0], approximate=False)
    return h @ w2 + b2[0]


if __name__ == "__main__":
    # Config: embed_size=32, feed_forward_expansion=4, batch=2, seq=8
    B, S, E, FF = 2, 8, 32, 4
    H = FF * E  # 128

    key = jax.random.PRNGKey(0)
    kx, k1, k2 = jax.random.split(key, 3)

    x = jax.random.normal(kx, (B, S, E), dtype=jnp.float32)

    def init_linear(k, fan_in, fan_out):
        # deterministic init mimicking nn.Linear's uniform(-1/sqrt(fan_in), ...);
        # weight stored pre-transposed as (in, out).
        kw, kb = jax.random.split(k)
        bound = 1.0 / math.sqrt(fan_in)
        w = jax.random.uniform(kw, (fan_in, fan_out), jnp.float32, -bound, bound)
        b = jax.random.uniform(kb, (1, fan_out), jnp.float32, -bound, bound)
        return w, b

    w1, b1 = init_linear(k1, E, H)
    w2, b2 = init_linear(k2, H, E)
    params = (w1, b1, w2, b2)

    out = feed_forward(x, params)
    out = jax.block_until_ready(out)

    ref = _reference(x, params)
    assert out.shape == (B, S, E)
    # bf16 MXU operands -> loosen tolerance vs the f32 reference.
    assert jnp.allclose(out, ref, atol=2e-2, rtol=2e-2), "mismatch vs reference"

    print("KERNEL_OK")
</pallas_src>

<mosaic_0001>
module attributes {stable_mosaic.version = 11 : i64} {
  func.func @ffn_kernel(%arg0: i32, %arg1: memref<16x32xbf16, #tpu.memory_space<vmem>>, %arg2: memref<32x128xbf16, #tpu.memory_space<vmem>>, %arg3: memref<1x128xf32, #tpu.memory_space<vmem>>, %arg4: memref<128x32xbf16, #tpu.memory_space<vmem>>, %arg5: memref<1x32xf32, #tpu.memory_space<vmem>>, %arg6: memref<16x32xf32, #tpu.memory_space<vmem>>) attributes {dimension_semantics = [#tpu.dimension_semantics<parallel>], iteration_bounds = array<i64: 1>, scalar_prefetch = 0 : i64, scratch_operands = 0 : i64, tpu.core_type = #tpu.core_type<tc>, window_params = [{transform_indices = @transform_0, window_bounds = array<i64: 16, 32>}, {pipeline_mode = #tpu.pipeline_mode<synchronous>, transform_indices = @transform_1, window_bounds = array<i64: 32, 128>}, {pipeline_mode = #tpu.pipeline_mode<synchronous>, transform_indices = @transform_2, window_bounds = array<i64: 1, 128>}, {pipeline_mode = #tpu.pipeline_mode<synchronous>, transform_indices = @transform_3, window_bounds = array<i64: 128, 32>}, {pipeline_mode = #tpu.pipeline_mode<synchronous>, transform_indices = @transform_4, window_bounds = array<i64: 1, 32>}, {transform_indices = @transform_5, window_bounds = array<i64: 16, 32>}]} {
    %c0 = arith.constant 0 : index
    %c0_0 = arith.constant 0 : index
    %0 = vector.load %arg1[%c0, %c0_0] : memref<16x32xbf16, #tpu.memory_space<vmem>>, vector<16x32xbf16>
    %c0_1 = arith.constant 0 : index
    %c0_2 = arith.constant 0 : index
    %1 = vector.load %arg2[%c0_1, %c0_2] : memref<32x128xbf16, #tpu.memory_space<vmem>>, vector<32x128xbf16>
    %cst = arith.constant dense<0.000000e+00> : vector<16x128xf32>
    %2 = tpu.matmul %0, %1, %cst {dimension_numbers = #tpu.dot_dimension_numbers<[1], [0], [0], [1], [0, 0, 1, 1], [], []>} : vector<16x32xbf16>, vector<32x128xbf16>, vector<16x128xf32> -> vector<16x128xf32>
    %c0_3 = arith.constant 0 : index
    %c0_4 = arith.constant 0 : index
    %3 = vector.load %arg3[%c0_3, %c0_4] : memref<1x128xf32, #tpu.memory_space<vmem>>, vector<1x128xf32>
    %4 = vector.shape_cast %3 : vector<1x128xf32> to vector<128xf32>
    %5 = vector.shape_cast %4 : vector<128xf32> to vector<1x128xf32>
    %6 = vector.broadcast %5 : vector<1x128xf32> to vector<16x128xf32>
    %7 = arith.addf %2, %6 : vector<16x128xf32>
    %cst_5 = arith.constant 5.000000e-01 : f32
    %8 = vector.broadcast %cst_5 : f32 to vector<16x128xf32>
    %9 = arith.mulf %8, %7 : vector<16x128xf32>
    %cst_6 = arith.constant 0.707106769 : f32
    %10 = vector.broadcast %cst_6 : f32 to vector<16x128xf32>
    %11 = arith.mulf %7, %10 : vector<16x128xf32>
    %12 = math.absf %11 : vector<16x128xf32>
    %cst_7 = arith.constant 0.327591091 : f32
    %13 = vector.broadcast %cst_7 : f32 to vector<16x128xf32>
    %14 = arith.mulf %13, %12 : vector<16x128xf32>
    %cst_8 = arith.constant 1.000000e+00 : f32
    %15 = vector.broadcast %cst_8 : f32 to vector<16x128xf32>
    %16 = arith.addf %15, %14 : vector<16x128xf32>
    %17 = tpu.reciprocal %16 {approx = true} : vector<16x128xf32> -> vector<16x128xf32>
    %18 = arith.mulf %16, %17 : vector<16x128xf32>
    %cst_9 = arith.constant 2.000000e+00 : f32
    %19 = vector.broadcast %cst_9 : f32 to vector<16x128xf32>
    %20 = arith.subf %19, %18 : vector<16x128xf32>
    %21 = arith.mulf %17, %20 : vector<16x128xf32>
    %cst_10 = arith.constant 1.06140542 : f32
    %22 = vector.broadcast %cst_10 : f32 to vector<16x128xf32>
    %23 = arith.mulf %22, %21 : vector<16x128xf32>
    %cst_11 = arith.constant -1.45315206 : f32
    %24 = vector.broadcast %cst_11 : f32 to vector<16x128xf32>
    %25 = arith.addf %23, %24 : vector<16x128xf32>
    %26 = arith.mulf %25, %21 : vector<16x128xf32>
    %cst_12 = arith.constant 1.42141378 : f32
    %27 = vector.broadcast %cst_12 : f32 to vector<16x128xf32>
    %28 = arith.addf %26, %27 : vector<16x128xf32>
    %29 = arith.mulf %28, %21 : vector<16x128xf32>
    %cst_13 = arith.constant -0.284496725 : f32
    %30 = vector.broadcast %cst_13 : f32 to vector<16x128xf32>
    %31 = arith.addf %29, %30 : vector<16x128xf32>
    %32 = arith.mulf %31, %21 : vector<16x128xf32>
    %cst_14 = arith.constant 0.254829586 : f32
    %33 = vector.broadcast %cst_14 : f32 to vector<16x128xf32>
    %34 = arith.addf %32, %33 : vector<16x128xf32>
    %35 = arith.mulf %34, %21 : vector<16x128xf32>
    %cst_15 = arith.constant 0.000000e+00 : f32
    %36 = vector.broadcast %cst_15 : f32 to vector<16x128xf32>
    %37 = arith.subf %36, %12 : vector<16x128xf32>
    %38 = arith.mulf %37, %12 : vector<16x128xf32>
    %39 = math.exp %38 : vector<16x128xf32>
    %40 = arith.mulf %35, %39 : vector<16x128xf32>
    %cst_16 = arith.constant 1.000000e+00 : f32
    %41 = vector.broadcast %cst_16 : f32 to vector<16x128xf32>
    %42 = arith.subf %41, %40 : vector<16x128xf32>
    %cst_17 = arith.constant 0.000000e+00 : f32
    %43 = vector.broadcast %cst_17 : f32 to vector<16x128xf32>
    %44 = arith.cmpf olt, %11, %43 : vector<16x128xf32>
    %cst_18 = arith.constant 0.000000e+00 : f32
    %45 = vector.broadcast %cst_18 : f32 to vector<16x128xf32>
    %46 = arith.subf %45, %42 : vector<16x128xf32>
    %47 = arith.select %44, %46, %42 : vector<16x128xi1>, vector<16x128xf32>
    %cst_19 = arith.constant 1.000000e+00 : f32
    %48 = vector.broadcast %cst_19 : f32 to vector<16x128xf32>
    %49 = arith.addf %48, %47 : vector<16x128xf32>
    %50 = arith.mulf %9, %49 : vector<16x128xf32>
    %51 = arith.truncf %50 : vector<16x128xf32> to vector<16x128xbf16>
    %c0_20 = arith.constant 0 : index
    %c0_21 = arith.constant 0 : index
    %52 = vector.load %arg4[%c0_20, %c0_21] : memref<128x32xbf16, #tpu.memory_space<vmem>>, vector<128x32xbf16>
    %cst_22 = arith.constant dense<0.000000e+00> : vector<16x32xf32>
    %53 = tpu.matmul %51, %52, %cst_22 {dimension_numbers = #tpu.dot_dimension_numbers<[1], [0], [0], [1], [0, 0, 1, 1], [], []>} : vector<16x128xbf16>, vector<128x32xbf16>, vector<16x32xf32> -> vector<16x32xf32>
    %c0_23 = arith.constant 0 : index
    %c0_24 = arith.constant 0 : index
    %54 = vector.load %arg5[%c0_23, %c0_24] : memref<1x32xf32, #tpu.memory_space<vmem>>, vector<1x32xf32>
    %55 = vector.shape_cast %54 : vector<1x32xf32> to vector<32xf32>
    %56 = vector.shape_cast %55 : vector<32xf32> to vector<1x32xf32>
    %57 = vector.broadcast %56 : vector<1x32xf32> to vector<16x32xf32>
    %58 = arith.addf %53, %57 : vector<16x32xf32>
    %c0_25 = arith.constant 0 : index
    %c0_26 = arith.constant 0 : index
    %59 = vector.load %arg6[%c0_25, %c0_26] : memref<16x32xf32, #tpu.memory_space<vmem>>, vector<16x32xf32>
    tpu.vector_store %arg6[%c0_25, %c0_26], %58 {strides = array<i32>} : memref<16x32xf32, #tpu.memory_space<vmem>>, vector<16x32xf32>,
    return
  }
  func.func @transform_0(%arg0: i32) -> (i32, i32) {
    %c0_i32 = arith.constant 0 : i32
    %c0_i32_0 = arith.constant 0 : i32
    return %arg0, %c0_i32 : i32, i32
  }
  func.func @transform_1(%arg0: i32) -> (i32, i32) {
    %c0_i32 = arith.constant 0 : i32
    %c0_i32_0 = arith.constant 0 : i32
    %c0_i32_1 = arith.constant 0 : i32
    return %c0_i32, %c0_i32_0 : i32, i32
  }
  func.func @transform_2(%arg0: i32) -> (i32, i32) {
    %c0_i32 = arith.constant 0 : i32
    %c0_i32_0 = arith.constant 0 : i32
    %c0_i32_1 = arith.constant 0 : i32
    return %c0_i32, %c0_i32_0 : i32, i32
  }
  func.func @transform_3(%arg0: i32) -> (i32, i32) {
    %c0_i32 = arith.constant 0 : i32
    %c0_i32_0 = arith.constant 0 : i32
    %c0_i32_1 = arith.constant 0 : i32
    return %c0_i32, %c0_i32_0 : i32, i32
  }
  func.func @transform_4(%arg0: i32) -> (i32, i32) {
    %c0_i32 = arith.constant 0 : i32
    %c0_i32_0 = arith.constant 0 : i32
    %c0_i32_1 = arith.constant 0 : i32
    return %c0_i32, %c0_i32_0 : i32, i32
  }
  func.func @transform_5(%arg0: i32) -> (i32, i32) {
    %c0_i32 = arith.constant 0 : i32
    %c0_i32_0 = arith.constant 0 : i32
    return %arg0, %c0_i32 : i32, i32
  }
}

</mosaic_0001>

<llo_original>
// kernel: tpu_custom_call.1
$region0: #{tpu_custom_call.1}
  #allocation0 [shape = 'u32[]', space=smem, size = 0x4, offset = 0x4, fixed_abs, tag = 'smem constant byte address 0x4 - core index']
  #allocation1 [shape = 'u32[144,128]{1,0:T(1,128)}', space=vmem, size = 0x12000, scoped, tag = 'internal scratch']
  %s0 = inlined_call_operand.vmem [shape: bf16[16,32], index: 0, kind: input, shape index: {}]
  %s1 = inlined_call_operand.vmem [shape: bf16[32,128], index: 1, kind: input, shape index: {}]
  %s2 = inlined_call_operand.vmem [shape: f32[1,128], index: 2, kind: input, shape index: {}]
  %s3 = inlined_call_operand.vmem [shape: bf16[128,32], index: 3, kind: input, shape index: {}]
  %s4 = inlined_call_operand.vmem [shape: f32[1,32], index: 4, kind: input, shape index: {}]
  %s5 = inlined_call_operand.hbm [shape: f32[16,32], index: 5, kind: output, shape index: {}]
  %s6 = sld [smem:[#allocation0]]
  $region30: #{tpu_custom_call.1} parent=0
    _
  %s8 = ssub.s32 1, %s6
  %s9 = scalar_select 0, %s8, %s6
  $region1: #{tpu_custom_call.1} parent=0
    #allocation2 [shape = 'u8[8192]{0}', space=vmem, size = 0x2000, scoped, tag = 'output window, operand 0, single buffered']
    #allocation3 [shape = 's32[1]{0}', space=sflag, size = 0x4, scoped, tag = 'scoped memory for tpu_custom_call.1']
    %10 = vsyncpa [#allocation3], 0
    // Predicated region
    $region2: #{tpu_custom_call.1} parent=1 // pred_check
      _
    $region3: #{tpu_custom_call.1} parent=1 // pred_check_branch
      %12 = sbr.rel (0) target = $region5
    $region4: #{tpu_custom_call.1} parent=1 // pred_region
      _
    $region5: #{tpu_custom_call.1} parent=1 // pred_fallthru
      _
    // Predicated region
    $region6: #{tpu_custom_call.1} parent=1 // pred_check
      _
    $region7: #{tpu_custom_call.1} parent=1 // pred_check_branch
      %14 = sbr.rel (0) target = $region9
    $region8: #{tpu_custom_call.1} parent=1 // pred_region
      _
    $region9: #{tpu_custom_call.1} parent=1 // pred_fallthru
      _
    // Predicated region
    $region10: #{tpu_custom_call.1} parent=1 // pred_check
      _
    $region11: #{tpu_custom_call.1} parent=1 // pred_check_branch
      %16 = sbr.rel (0) target = $region13
    $region12: #{tpu_custom_call.1} parent=1 // pred_region
      _
    $region13: #{tpu_custom_call.1} parent=1 // pred_fallthru
      _
    // Predicated region
    $region14: #{tpu_custom_call.1} parent=1 // pred_check
      _
    $region15: #{tpu_custom_call.1} parent=1 // pred_check_branch
      %18 = sbr.rel (0) target = $region17
    $region16: #{tpu_custom_call.1} parent=1 // pred_region
      _
    $region17: #{tpu_custom_call.1} parent=1 // pred_fallthru
      _
    // Predicated region
    $region18: #{tpu_custom_call.1} parent=1 // pred_check
      _
    $region19: #{tpu_custom_call.1} parent=1 // pred_check_branch
      %20 = sbr.rel (0) target = $region21
    $region20: #{tpu_custom_call.1} parent=1 // pred_region
      _
    $region21: #{tpu_custom_call.1} parent=1 // pred_fallthru
      _
    %v22 = vld [vmem:[%s0] sm:$0xf]
    %v23 = vld [vmem:[%s0 + $0x4] sm:$0xf]
    %v24 = vld [vmem:[%s1] sm:$0xf]
    %v25 = vld [vmem:[%s1 + $0x4] sm:$0xf]
    %v26 = vld [vmem:[%s1 + $0x8] sm:$0xf]
    %v27 = vld [vmem:[%s1 + $0xc] sm:$0xf]
    %v28 = vld [vmem:[%s2] sm:$0x1]
    %v30 = vlaneseq
    %v31 = vshrl.u32 %v30, 7
    %v32 = vsub.s32 0, %v31
    %v33 = vrot.slane %v28, %v32
    %v37 = vunpack.c.l.b16 %v22
    %v38 = vunpack.c.l.b16 %v23
    %v39 = vpack.c.b16 %v38, %v37
    %v44 = vunpack.c.l.b16 %v24
    %v45 = vunpack.c.l.b16 %v25
    %v46 = vunpack.c.l.b16 %v26
    %v47 = vunpack.c.l.b16 %v27
    %v48 = vpack.c.b16 %v45, %v44
    %v49 = vpack.c.b16 %v47, %v46
    %vm52 = vcmask 261120
    %v54 = vsel %vm52, %v39, 0
    %56 = vmatprep.subr.bf16.mxu0 0
    %57 = vmatpush1.bf16.msra.mxu0 0
    %58 = vmatprep.subr.bf16.mxu0 0
    %59 = vmatpush1.bf16.msra.mxu0 0
    %60 = vmatprep.subr.bf16.mxu0 0
    %61 = vmatpush1.bf16.msra.mxu0 0
    %62 = vmatprep.subr.bf16.mxu0 0
    %63 = vmatpush1.bf16.msra.mxu0 0
    %64 = vmatprep.subr.bf16.mxu0 0
    %65 = vmatpush1.bf16.msra.mxu0 0
    %66 = vmatprep.subr.bf16.mxu0 0
    %67 = vmatpush1.bf16.msra.mxu0 0
    %68 = vmatprep.subr.bf16.mxu0 0
    %69 = vmatpush1.bf16.msra.mxu0 %v49
    %70 = vmatprep.subr.bf16.mxu0 0
    %71 = vmatpush1.bf16.msra.mxu0 %v48
    %72 = vmatprep.subr.bf16.mxu0 0
    %73 = vmatpush2.bf16.msra.mxu0 0
    %74 = vmatprep.subr.bf16.mxu0 0
    %75 = vmatpush2.bf16.msra.mxu0 0
    %76 = vmatprep.subr.bf16.mxu0 0
    %77 = vmatpush2.bf16.msra.mxu0 0
    %78 = vmatprep.subr.bf16.mxu0 0
    %79 = vmatpush2.bf16.msra.mxu0 0
    %80 = vmatprep.subr.bf16.mxu0 0
    %81 = vmatpush2.bf16.msra.mxu0 0
    %82 = vmatprep.subr.bf16.mxu0 0
    %83 = vmatpush2.bf16.msra.mxu0 0
    %84 = vmatprep.subr.bf16.mxu0 0
    %85 = vmatpush2.bf16.msra.mxu0 0
    %86 = vmatprep.subr.bf16.mxu0 0
    %87 = vmatpush2.bf16.msra.mxu0 0
    %88 = vmatprep.mubr.bf16.mxu0 0
    %89 = vmatmul.mubr.bf16.gmra.mxu0 %v54
    %v90 = vpop.f32.mrf.mxu0
    %v91 = vadd.f32 %v33, %v90
    %v92 = vpop.f32.mrf.mxu0
    %v93 = vpop.f32.mrf.mxu0
    %v94 = vadd.f32 %v33, %v93
    %v95 = vpop.f32.mrf.mxu0
    %96 = vdwg.mxu0
    %v97 = vmul.f32 %v91, 0.5
    %v98 = vmul.f32 %v94, 0.5
    %v99 = vmul.f32 %v91, 0.70710677
    %v100 = vmul.f32 %v94, 0.70710677
    %v101 = vand.u32 2147483647, %v99
    %v102 = vand.u32 2147483647, %v100
    %v103 = vmul.f32 %v101, 0.3275911
    %v104 = vmul.f32 %v102, 0.3275911
    %v105 = vadd.f32 %v103, 1.0
    %v106 = vadd.f32 %v104, 1.0
    %v107 = vrcp.pop %v105
    %v108 = vrcp.pop %v106
    %v109 = vmul.f32 %v105, %v107
    %v110 = vmul.f32 %v106, %v108
    %v111 = vsub.f32 2.0, %v109
    %v112 = vsub.f32 2.0, %v110
    %v113 = vmul.f32 %v107, %v111
    %v114 = vmul.f32 %v108, %v112
    %v115 = vmul.f32 %v113, 1.0614054
    %v116 = vmul.f32 %v114, 1.0614054
    %v117 = vadd.f32 %v115, -1.4531521
    %v118 = vadd.f32 %v116, -1.4531521
    %v119 = vmul.f32 %v117, %v113
    %v120 = vmul.f32 %v118, %v114
    %v121 = vadd.f32 %v119, 1.4214138
    %v122 = vadd.f32 %v120, 1.4214138
    %v123 = vmul.f32 %v121, %v113
    %v124 = vmul.f32 %v122, %v114
    %v125 = vadd.f32 %v123, -0.28449672
    %v126 = vadd.f32 %v124, -0.28449672
    %v127 = vmul.f32 %v125, %v113
    %v128 = vmul.f32 %v126, %v114
    %v129 = vadd.f32 %v127, 0.2548296
    %v130 = vadd.f32 %v128, 0.2548296
    %v131 = vmul.f32 %v129, %v113
    %v132 = vmul.f32 %v130, %v114
    %v133 = vsub.f32 0.0, %v101
    %v134 = vsub.f32 0.0, %v102
    %v135 = vmul.f32 %v133, %v101
    %v136 = vmul.f32 %v134, %v102
    %v137 = vmul.f32 %v135, 1.442695
    %v138 = vpow.pop %v137
    %v139 = vmul.f32 %v136, 1.442695
    %v140 = vpow.pop %v139
    %v141 = vmul.f32 %v131, %v138
    %v142 = vmul.f32 %v132, %v140
    %v143 = vsub.f32 1.0, %v141
    %v144 = vsub.f32 1.0, %v142
    %vm145 = vcmp.lt.f32.partialorder %v99, 0.0
    %vm146 = vcmp.lt.f32.partialorder %v100, 0.0
    %v147 = vsub.f32 0.0, %v143
    %v148 = vsub.f32 0.0, %v144
    %v149 = vsel %vm145, %v147, %v143
    %v150 = vsel %vm146, %v148, %v144
    %v151 = vadd.f32 %v149, 1.0
    %v152 = vadd.f32 %v150, 1.0
    %v153 = vmul.f32 %v97, %v151
    %v154 = vmul.f32 %v98, %v152
    %v155 = vpack.c.bf16 %v154, %v153
    %v156 = vld [vmem:[%s3] sm:$0xf]
    %v157 = vld [vmem:[%s3 + $0x4] sm:$0xf]
    %v158 = vld [vmem:[%s3 + $0x8] sm:$0xf]
    %v159 = vld [vmem:[%s3 + $0xc] sm:$0xf]
    %v160 = vld [vmem:[%s3 + $0x10] sm:$0xf]
    %v161 = vld [vmem:[%s3 + $0x14] sm:$0xf]
    %v162 = vld [vmem:[%s3 + $0x18] sm:$0xf]
    %v163 = vld [vmem:[%s3 + $0x1c] sm:$0xf]
    %v164 = vld [vmem:[%s3 + $0x20] sm:$0xf]
    %v165 = vld [vmem:[%s3 + $0x24] sm:$0xf]
    %v166 = vld [vmem:[%s3 + $0x28] sm:$0xf]
    %v167 = vld [vmem:[%s3 + $0x2c] sm:$0xf]
    %v168 = vld [vmem:[%s3 + $0x30] sm:$0xf]
    %v169 = vld [vmem:[%s3 + $0x34] sm:$0xf]
    %v170 = vld [vmem:[%s3 + $0x38] sm:$0xf]
    %v171 = vld [vmem:[%s3 + $0x3c] sm:$0xf]
    %v172 = vld [vmem:[%s4] sm:$0x1]
    %v174 = vlaneseq
    %v175 = vshrl.u32 %v174, 7
    %v176 = vsub.s32 0, %v175
    %v177 = vrot.slane %v172, %v176
    %v195 = vunpack.c.l.b16 %v156
    %v196 = vunpack.c.l.b16 %v157
    %v197 = vunpack.c.l.b16 %v158
    %v198 = vunpack.c.l.b16 %v159
    %v199 = vunpack.c.l.b16 %v160
    %v200 = vunpack.c.l.b16 %v161
    %v201 = vunpack.c.l.b16 %v162
    %v202 = vunpack.c.l.b16 %v163
    %v203 = vunpack.c.l.b16 %v164
    %v204 = vunpack.c.l.b16 %v165
    %v205 = vunpack.c.l.b16 %v166
    %v206 = vunpack.c.l.b16 %v167
    %v207 = vunpack.c.l.b16 %v168
    %v208 = vunpack.c.l.b16 %v169
    %v209 = vunpack.c.l.b16 %v170
    %v210 = vunpack.c.l.b16 %v171
    %v211 = vpack.c.b16 %v196, %v195
    %v212 = vpack.c.b16 %v198, %v197
    %v213 = vpack.c.b16 %v200, %v199
    %v214 = vpack.c.b16 %v202, %v201
    %v215 = vpack.c.b16 %v204, %v203
    %v216 = vpack.c.b16 %v206, %v205
    %v217 = vpack.c.b16 %v208, %v207
    %v218 = vpack.c.b16 %v210, %v209
    %227 = vmatprep.subr.bf16.mxu0 0
    %228 = vmatpush1.bf16.msra.mxu0 %v218
    %229 = vmatprep.subr.bf16.mxu0 0
    %230 = vmatpush1.bf16.msra.mxu0 %v217
    %231 = vmatprep.subr.bf16.mxu0 0
    %232 = vmatpush1.bf16.msra.mxu0 %v216
    %233 = vmatprep.subr.bf16.mxu0 0
    %234 = vmatpush1.bf16.msra.mxu0 %v215
    %235 = vmatprep.subr.bf16.mxu0 0
    %236 = vmatpush1.bf16.msra.mxu0 %v214
    %237 = vmatprep.subr.bf16.mxu0 0
    %238 = vmatpush1.bf16.msra.mxu0 %v213
    %239 = vmatprep.subr.bf16.mxu0 0
    %240 = vmatpush1.bf16.msra.mxu0 %v212
    %241 = vmatprep.subr.bf16.mxu0 0
    %242 = vmatpush1.bf16.msra.mxu0 %v211
    %243 = vmatprep.subr.bf16.mxu0 0
    %244 = vmatpush2.bf16.msra.mxu0 0
    %245 = vmatprep.subr.bf16.mxu0 0
    %246 = vmatpush2.bf16.msra.mxu0 0
    %247 = vmatprep.subr.bf16.mxu0 0
    %248 = vmatpush2.bf16.msra.mxu0 0
    %249 = vmatprep.subr.bf16.mxu0 0
    %250 = vmatpush2.bf16.msra.mxu0 0
    %251 = vmatprep.subr.bf16.mxu0 0
    %252 = vmatpush2.bf16.msra.mxu0 0
    %253 = vmatprep.subr.bf16.mxu0 0
    %254 = vmatpush2.bf16.msra.mxu0 0
    %255 = vmatprep.subr.bf16.mxu0 0
    %256 = vmatpush2.bf16.msra.mxu0 0
    %257 = vmatprep.subr.bf16.mxu0 0
    %258 = vmatpush2.bf16.msra.mxu0 0
    %259 = vmatprep.mubr.bf16.mxu0 0
    %260 = vmatmul.mubr.bf16.gmra.mxu0 %v155
    %v261 = vpop.f32.mrf.mxu0
    %v262 = vadd.f32 %v177, %v261
    %v263 = vpop.f32.mrf.mxu0
    %v264 = vpop.f32.mrf.mxu0
    %v265 = vadd.f32 %v177, %v264
    %v266 = vpop.f32.mrf.mxu0
    %267 = vdwg.mxu0
    %268 = vst.msk [vmem:[#allocation2] sm:$0xff] %vm52, %v262
    %269 = vst.msk [vmem:[#allocation2 + $0x8] sm:$0xff] %vm52, %v265
    // Predicated region
    $region22: #{tpu_custom_call.1} parent=1 // pred_check
      _
    $region23: #{tpu_custom_call.1} parent=1 // pred_check_branch
      %271 = sbr.rel (0) target = $region25
    $region24: #{tpu_custom_call.1} parent=1 // pred_region
      %s273 = ssub.s32 256, 256
      %274 = vsyncadd [#allocation3], %s273
      %s275 = sshll.u32 [#allocation2], 4
      %s276 = int_to_ptr.vmem [resolvable:$true] %s275
      %281 = dma.vmem_to_hbm [thread:$0]  %s276, 256, %s5, [#allocation3], 128, 128, 8
    $region25: #{tpu_custom_call.1} parent=1 // pred_fallthru
      _
    // Predicated region
    $region26: #{tpu_custom_call.1} parent=1 // pred_check
      _
    $region27: #{tpu_custom_call.1} parent=1 // pred_check_branch
      %283 = sbr.rel (0) target = $region29
    $region28: #{tpu_custom_call.1} parent=1 // pred_region
      %284 = dma.done [#allocation3], 256
    $region29: #{tpu_custom_call.1} parent=1 // pred_fallthru
      _
    %285 = vsyncpa [#allocation3], 1

</llo_original>
